<compile_context>
chip_gen: v5e
topology: v5e:2x2
jax: 0.10.0
libtpu: 0.0.40
codegen_flags: <defaults>
</compile_context>

<pallas_src>
import functools

import jax
import jax.numpy as jnp
from jax.experimental import pallas as pl
from jax.experimental.pallas import tpu as pltpu


def _gated_update_kernel(node_ref, agg_ref, w_ref, b_ref, out_ref):
    node = node_ref[...]                             # (tn, F)  stream dtype
    agg = agg_ref[...]                               # (tn, F)
    F = node.shape[-1]

    # Lane-aligned concat (F is a multiple of 128 in the intended layout) ->
    # ONE K=2F dot that fills the 256-deep MXU on v6e/v7x; f32 accumulation.
    x = jnp.concatenate([node, agg], axis=-1)        # (tn, 2F)
    pre = (jnp.dot(x, w_ref[...], preferred_element_type=jnp.float32)
           + b_ref[...])                             # (tn, 2F) f32

    # prepare_params folded the 0.5 pre-scale into the gate half, so a single
    # tanh over the full slab yields both activations (one EUP pass):
    #   sigmoid(z) == 0.5 * (1 + tanh(z/2))
    t = jnp.tanh(pre)
    gate = 0.5 * t[:, :F] + 0.5                      # lane-aligned slice
    cand = t[:, F:]

    node_f32 = node.astype(jnp.float32)
    out = node_f32 + gate * (cand - node_f32)        # == (1-g)*node + g*cand
    out_ref[...] = out.astype(out_ref.dtype)


def prepare_params(w_gate, b_gate, w_transform, b_transform):
    """One-time parameter prep (do NOT call per forward pass).

    w_gate, w_transform : [F, 2F]   (PyTorch Linear layout: [out, in])
    b_gate, b_transform : [F]

    Returns:
      w_t  : (2F_in, 2F_out)  fused transposed weight; gate columns pre-scaled
             by 0.5 (exact) so the kernel can use sigmoid(z)=0.5*(1+tanh(z/2)).
      bias : (1, 2F)          [0.5*b_gate | b_transform]
    """
    F = w_gate.shape[0]
    w_cat = jnp.concatenate([0.5 * w_gate, w_transform], axis=0)   # (2F_out, 2F_in)
    w_t = jnp.transpose(w_cat).astype(jnp.float32)                 # (2F_in, 2F_out)
    bias = jnp.concatenate([0.5 * b_gate, b_transform]).reshape(1, 2 * F)
    return w_t, bias.astype(jnp.float32)


def _vmem_bytes(tile_n, feature_dim):
    """Rough VMEM footprint: double-buffered streams + resident weights + f32 temps."""
    f2 = 2 * feature_dim
    streams = 3 * 2 * tile_n * feature_dim * 4       # node/agg/out, double-buffered
    temps = 5 * tile_n * f2 * 4                      # pre / tanh / gate / cand / out
    weights = 2 * f2 * f2 * 4 + 2 * 8 * f2 * 4       # W_t (dbl-buf) + padded bias
    return streams + temps + weights


def _choose_tile_n(n_rows, feature_dim, max_tile=2048, min_blocks=8,
                   vmem_budget=40 << 20):
    """Largest power-of-two row tile that fits the VMEM budget and still gives
    >= min_blocks grid steps (keeps the pipeline filled / both v7x TCs busy)."""
    t = max_tile
    while t > 8 and _vmem_bytes(t, feature_dim) > vmem_budget:
        t //= 2
    while t > 8 and pl.cdiv(n_rows, t) < min_blocks:
        t //= 2
    return max(t, 8)


@functools.partial(jax.jit, static_argnames=("tile_n", "stream_dtype"))
def gated_graph_update(node_features, aggregated_features, w_t, bias, *,
                       tile_n=None, stream_dtype=None):
    """Pallas implementation of GatedGraphUpdate.forward.

    node_features, aggregated_features : [..., F]   (F ideally a multiple of 128)
    w_t, bias                          : from prepare_params()
    stream_dtype                       : e.g. jnp.bfloat16 for the memory-bound
                                         fast path (~1e-3 rel. error).
    """
    orig_shape = node_features.shape
    out_dtype = node_features.dtype
    F = orig_shape[-1]
    node2d = node_features.reshape(-1, F)
    agg2d = aggregated_features.reshape(-1, F)
    N = node2d.shape[0]

    if stream_dtype is not None:
        # bf16 streams halve HBM read traffic; dot still accumulates in f32.
        node2d = node2d.astype(stream_dtype)
        agg2d = agg2d.astype(stream_dtype)
        w_t = w_t.astype(stream_dtype)

    if tile_n is None:
        tile_n = _choose_tile_n(N, F)
    # No padding: ragged last block is masked by Pallas (rows independent,
    # out-of-range stores dropped; garbage input rows never reduced over).
    n_blocks = pl.cdiv(N, tile_n)

    out = pl.pallas_call(
        _gated_update_kernel,
        out_shape=jax.ShapeDtypeStruct((N, F), out_dtype),
        grid_spec=pltpu.PrefetchScalarGridSpec(
            num_scalar_prefetch=0,
            grid=(n_blocks,),
            in_specs=[
                pl.BlockSpec((tile_n, F), lambda i: (i, 0)),     # node tile
                pl.BlockSpec((tile_n, F), lambda i: (i, 0)),     # agg tile
                pl.BlockSpec((2 * F, 2 * F), lambda i: (0, 0)),  # W_t (resident)
                pl.BlockSpec((1, 2 * F), lambda i: (0, 0)),      # bias (resident)
            ],
            out_specs=pl.BlockSpec((tile_n, F), lambda i: (i, 0)),
        ),
        compiler_params=pltpu.CompilerParams(
            dimension_semantics=("parallel",),
            vmem_limit_bytes=int(min(max(2 * _vmem_bytes(tile_n, F), 32 << 20),
                                     48 << 20)),
        ),
    )(node2d, agg2d, w_t, bias)

    return out.reshape(orig_shape)


def _reference(node, agg, w_gate, b_gate, w_transform, b_transform):
    gate_in = jnp.concatenate([node, agg], axis=-1)
    gate = jax.nn.sigmoid(gate_in @ w_gate.T + b_gate)
    cand = jnp.tanh(gate_in @ w_transform.T + b_transform)
    return (1.0 - gate) * node + gate * cand


if __name__ == "__main__":
    feature_dim = 128          # F (lane-aligned)
    num_nodes = 256            # N (flattened node count)

    key = jax.random.PRNGKey(0)
    k_node, k_agg, k_wg, k_bg, k_wt, k_bt = jax.random.split(key, 6)

    node = jax.random.normal(k_node, (num_nodes, feature_dim), jnp.float32)
    agg = jax.random.normal(k_agg, (num_nodes, feature_dim), jnp.float32)

    # PyTorch Linear shapes: W [F, 2F], b [F].
    bound = 1.0 / (2.0 * feature_dim) ** 0.5
    w_gate = jax.random.uniform(k_wg, (feature_dim, 2 * feature_dim),
                                jnp.float32, -bound, bound)
    b_gate = jax.random.uniform(k_bg, (feature_dim,), jnp.float32,
                                -bound, bound)
    w_transform = jax.random.uniform(k_wt, (feature_dim, 2 * feature_dim),
                                     jnp.float32, -bound, bound)
    b_transform = jax.random.uniform(k_bt, (feature_dim,), jnp.float32,
                                     -bound, bound)

    # One-time parameter prep (fused + transposed + 0.5-folded weights).
    w_t, bias = prepare_params(w_gate, b_gate, w_transform, b_transform)
    ref = _reference(node, agg, w_gate, b_gate, w_transform, b_transform)

    # Default f32 path.
    out = jax.block_until_ready(gated_graph_update(node, agg, w_t, bias))
    assert out.shape == ref.shape
    assert jnp.allclose(out, ref, atol=1e-5, rtol=1e-5), "mismatch (f32)"

    # Ragged N (no padding: Pallas masks the partial last block).
    n_odd = 200
    out_odd = jax.block_until_ready(
        gated_graph_update(node[:n_odd], agg[:n_odd], w_t, bias))
    assert jnp.allclose(out_odd, ref[:n_odd], atol=1e-5, rtol=1e-5), \
        "mismatch (ragged N)"

    # Optional bf16-stream fast path (memory-bound lever on v6e/v7x); loose tol.
    out_bf16 = jax.block_until_ready(
        gated_graph_update(node, agg, w_t, bias, stream_dtype=jnp.bfloat16))
    assert jnp.allclose(out_bf16, ref, atol=5e-2, rtol=5e-2), "mismatch (bf16)"

    print("KERNEL_OK")
</pallas_src>

<mosaic_0001>
module attributes {stable_mosaic.version = 11 : i64} {
  func.func @_gated_update_kernel(%arg0: i32, %arg1: memref<32x128xf32, #tpu.memory_space<vmem>>, %arg2: memref<32x128xf32, #tpu.memory_space<vmem>>, %arg3: memref<256x256xf32, #tpu.memory_space<vmem>>, %arg4: memref<1x256xf32, #tpu.memory_space<vmem>>, %arg5: memref<32x128xf32, #tpu.memory_space<vmem>>) attributes {dimension_semantics = [#tpu.dimension_semantics<parallel>], iteration_bounds = array<i64: 8>, scalar_prefetch = 0 : i64, scratch_operands = 0 : i64, tpu.core_type = #tpu.core_type<tc>, window_params = [{transform_indices = @transform_0, window_bounds = array<i64: 32, 128>}, {transform_indices = @transform_1, window_bounds = array<i64: 32, 128>}, {pipeline_mode = #tpu.pipeline_mode<synchronous>, transform_indices = @transform_2, window_bounds = array<i64: 256, 256>}, {pipeline_mode = #tpu.pipeline_mode<synchronous>, transform_indices = @transform_3, window_bounds = array<i64: 1, 256>}, {transform_indices = @transform_4, window_bounds = array<i64: 32, 128>}]} {
    %c0 = arith.constant 0 : index
    %c0_0 = arith.constant 0 : index
    %0 = vector.load %arg1[%c0, %c0_0] : memref<32x128xf32, #tpu.memory_space<vmem>>, vector<32x128xf32>
    %c0_1 = arith.constant 0 : index
    %c0_2 = arith.constant 0 : index
    %1 = vector.load %arg2[%c0_1, %c0_2] : memref<32x128xf32, #tpu.memory_space<vmem>>, vector<32x128xf32>
    %2 = tpu.concatenate %0, %1 in 1 : vector<32x128xf32>, vector<32x128xf32> -> vector<32x256xf32>
    %c0_3 = arith.constant 0 : index
    %c0_4 = arith.constant 0 : index
    %3 = vector.load %arg3[%c0_3, %c0_4] : memref<256x256xf32, #tpu.memory_space<vmem>>, vector<256x256xf32>
    %cst = arith.constant dense<0.000000e+00> : vector<32x256xf32>
    %4 = tpu.matmul %2, %3, %cst {dimension_numbers = #tpu.dot_dimension_numbers<[1], [0], [0], [1], [0, 0, 1, 1], [], []>} : vector<32x256xf32>, vector<256x256xf32>, vector<32x256xf32> -> vector<32x256xf32>
    %c0_5 = arith.constant 0 : index
    %c0_6 = arith.constant 0 : index
    %5 = vector.load %arg4[%c0_5, %c0_6] : memref<1x256xf32, #tpu.memory_space<vmem>>, vector<1x256xf32>
    %6 = vector.broadcast %5 : vector<1x256xf32> to vector<32x256xf32>
    %7 = arith.addf %4, %6 : vector<32x256xf32>
    %8 = math.tanh %7 : vector<32x256xf32>
    %9 = vector.extract_strided_slice %8 {offsets = [0, 0], sizes = [32, 128], strides = [1, 1]} : vector<32x256xf32> to vector<32x128xf32>
    %cst_7 = arith.constant 5.000000e-01 : f32
    %10 = vector.broadcast %cst_7 : f32 to vector<32x128xf32>
    %11 = arith.mulf %10, %9 : vector<32x128xf32>
    %cst_8 = arith.constant 5.000000e-01 : f32
    %12 = vector.broadcast %cst_8 : f32 to vector<32x128xf32>
    %13 = arith.addf %11, %12 : vector<32x128xf32>
    %14 = vector.extract_strided_slice %8 {offsets = [0, 128], sizes = [32, 128], strides = [1, 1]} : vector<32x256xf32> to vector<32x128xf32>
    %15 = arith.subf %14, %0 : vector<32x128xf32>
    %16 = arith.mulf %13, %15 : vector<32x128xf32>
    %17 = arith.addf %0, %16 : vector<32x128xf32>
    %c0_9 = arith.constant 0 : index
    %c0_10 = arith.constant 0 : index
    %18 = vector.load %arg5[%c0_9, %c0_10] : memref<32x128xf32, #tpu.memory_space<vmem>>, vector<32x128xf32>
    tpu.vector_store %arg5[%c0_9, %c0_10], %17 {strides = array<i32>} : memref<32x128xf32, #tpu.memory_space<vmem>>, vector<32x128xf32>,
    return
  }
  func.func @transform_0(%arg0: i32) -> (i32, i32) {
    %c0_i32 = arith.constant 0 : i32
    %c0_i32_0 = arith.constant 0 : i32
    return %arg0, %c0_i32 : i32, i32
  }
  func.func @transform_1(%arg0: i32) -> (i32, i32) {
    %c0_i32 = arith.constant 0 : i32
    %c0_i32_0 = arith.constant 0 : i32
    return %arg0, %c0_i32 : i32, i32
  }
  func.func @transform_2(%arg0: i32) -> (i32, i32) {
    %c0_i32 = arith.constant 0 : i32
    %c0_i32_0 = arith.constant 0 : i32
    %c0_i32_1 = arith.constant 0 : i32
    return %c0_i32, %c0_i32_0 : i32, i32
  }
  func.func @transform_3(%arg0: i32) -> (i32, i32) {
    %c0_i32 = arith.constant 0 : i32
    %c0_i32_0 = arith.constant 0 : i32
    %c0_i32_1 = arith.constant 0 : i32
    return %c0_i32, %c0_i32_0 : i32, i32
  }
  func.func @transform_4(%arg0: i32) -> (i32, i32) {
    %c0_i32 = arith.constant 0 : i32
    %c0_i32_0 = arith.constant 0 : i32
    return %arg0, %c0_i32 : i32, i32
  }
}

</mosaic_0001>

<llo_original>
// kernel: gated_graph_update.1
$region0: #{gated_graph_update.1}
  #allocation0 [shape = 'u32[]', space=smem, size = 0x4, offset = 0x4, fixed_abs, tag = 'smem constant byte address 0x4 - core index']
  #allocation1 [shape = 'u32[72,128]{1,0:T(1,128)}', space=vmem, size = 0x9000, scoped, tag = 'internal scratch']
  %s0 = inlined_call_operand.hbm [shape: f32[256,128], index: 0, kind: input, shape index: {}]
  %s1 = inlined_call_operand.hbm [shape: f32[256,128], index: 1, kind: input, shape index: {}]
  %s2 = inlined_call_operand.hbm [shape: f32[256,256], index: 2, kind: input, shape index: {}]
  %s3 = inlined_call_operand.vmem [shape: f32[1,256], index: 3, kind: input, shape index: {}]
  %s4 = inlined_call_operand.hbm [shape: f32[256,128], index: 4, kind: output, shape index: {}]
  %s5 = sld [smem:[#allocation0]]
  $region61: #{gated_graph_update.1} parent=0
    _
  %s7 = ssub.s32 1, %s5
  %s8 = scalar_select 0, %s7, %s5
  $region1: #{gated_graph_update.1} parent=0
    #allocation2 [shape = 'u8[32768]{0}', space=vmem, size = 0x8000, scoped, tag = 'input window, operand 0']
    #allocation3 [shape = 's32[2]{0}', space=sflag, size = 0x8, scoped, tag = 'scoped memory for gated_graph_update.1']
    #allocation4 [shape = 's32[2]{0}', space=sflag, size = 0x8, scoped, tag = 'scoped memory for gated_graph_update.1']
    #allocation5 [shape = 'u8[32768]{0}', space=vmem, size = 0x8000, scoped, tag = 'input window, operand 1']
    #allocation6 [shape = 's32[2]{0}', space=sflag, size = 0x8, scoped, tag = 'scoped memory for gated_graph_update.1']
    #allocation7 [shape = 'u8[262144]{0}', space=vmem, size = 0x40000, scoped, tag = 'input window, operand 2, single buffered']
    #allocation8 [shape = 'u8[32768]{0}', space=vmem, size = 0x8000, scoped, tag = 'output window, operand 0']
    %9 = vsyncpa [#allocation3], 0
    %s10 = scalar_lea.sflag [#allocation3], 1
    %11 = vsyncpa %s10, 0
    %12 = vsyncpa [#allocation6], 0
    %s13 = scalar_lea.sflag [#allocation6], 1
    %14 = vsyncpa %s13, 0
    %15 = vsyncpa [#allocation4], 0
    %s16 = scalar_lea.sflag [#allocation4], 1
    %17 = vsyncpa %s16, 0
    loop: start=0, step=1, limit=10
    $region2: #{gated_graph_update.1} parent=1 // loop_pre_header
      _
    $region3: #{gated_graph_update.1} parent=1 // loop_header
      %s19 = sphi 0, %s23
      %p20 = scmp.ge.s32.totalorder %s19, 10
      %s29 = sphi 0, %s31
      %s32 = sphi 0, %s29
      %s33 = sphi 0, %s32
      %s49 = sphi 0, %s33
      %s55 = sphi 0, %s57
      %s58 = sphi 0, %s55
      %s59 = sphi 0, %s58
      %s75 = sphi 0, %s59
      %s79 = sphi 0, %s79
      %s81 = sphi 0, %s79
      %s82 = sphi 0, %s81
      %s96 = sphi 0, %s82
      %s100 = sphi 0, %s100
      %s102 = sphi 0, %s100
      %s103 = sphi 0, %s102
      %s117 = sphi 0, %s103
      %s123 = sphi 0, %s125
      %s126 = sphi 0, %s123
      %s127 = sphi 0, %s126
      %s143 = sphi 0, %s127
    $region4: #{gated_graph_update.1} parent=1 // loop_header_branch
      %22 = sbr.rel (%p20) target = $region8
    $region5: #{gated_graph_update.1} parent=1 // loop_body
      %s24 = ssub.s32 %s19, 1
      %s25 = ssub.s32 %s19, 2
      %s26 = sadd.s32 %s19, 1
      %s27 = ssub.s32 %s19, %s26
      %p28 = scmp.eq.s32.totalorder %s27, 0
      %s30 = sadd.s32 %s29, 1
      %s31 = scalar_select %p28, %s29, %s30
      %p34 = pneg %p28
      %p35 = scmp.eq.s32.totalorder %s19, 7
      %p36 = por %p34, %p35
      %p37 = scmp.ne.s32.totalorder %s29, %s32
      %p38 = scmp.eq.s32.totalorder %s19, 0
      %p39 = por %p37, %p38
      %p40 = scmp.ne.s32.totalorder %s29, %s32
      %p41 = scmp.eq.s32.totalorder %s24, 7
      %p42 = por %p40, %p41
      %p43 = scmp.ne.s32.totalorder %s32, %s33
      %p44 = scmp.eq.s32.totalorder %s24, 0
      %p45 = por %p43, %p44
      %p46 = scmp.ne.s32.totalorder %s32, %s33
      %p47 = scmp.eq.s32.totalorder %s25, 7
      %p48 = por %p46, %p47
      %p50 = scmp.ne.s32.totalorder %s33, %s49
      %p51 = scmp.eq.s32.totalorder %s25, 0
      %p52 = por %p50, %p51
      %s53 = ssub.s32 %s19, %s26
      %p54 = scmp.eq.s32.totalorder %s53, 0
      %s56 = sadd.s32 %s55, 1
      %s57 = scalar_select %p54, %s55, %s56
      %p60 = pneg %p54
      %p61 = scmp.eq.s32.totalorder %s19, 7
      %p62 = por %p60, %p61
      %p63 = scmp.ne.s32.totalorder %s55, %s58
      %p64 = scmp.eq.s32.totalorder %s19, 0
      %p65 = por %p63, %p64
      %p66 = scmp.ne.s32.totalorder %s55, %s58
      %p67 = scmp.eq.s32.totalorder %s24, 7
      %p68 = por %p66, %p67
      %p69 = scmp.ne.s32.totalorder %s58, %s59
      %p70 = scmp.eq.s32.totalorder %s24, 0
      %p71 = por %p69, %p70
      %p72 = scmp.ne.s32.totalorder %s58, %s59
      %p73 = scmp.eq.s32.totalorder %s25, 7
      %p74 = por %p72, %p73
      %p76 = scmp.ne.s32.totalorder %s59, %s75
      %p77 = scmp.eq.s32.totalorder %s25, 0
      %p78 = por %p76, %p77
      %s80 = sadd.s32 %s79, 1
      %p83 = scmp.eq.s32.totalorder %s19, 7
      %p84 = scmp.ne.s32.totalorder %s79, %s81
      %p85 = scmp.eq.s32.totalorder %s19, 0
      %p86 = por %p84, %p85
      %p87 = scmp.ne.s32.totalorder %s79, %s81
      %p88 = scmp.eq.s32.totalorder %s24, 7
      %p89 = por %p87, %p88
      %p90 = scmp.ne.s32.totalorder %s81, %s82
      %p91 = scmp.eq.s32.totalorder %s24, 0
      %p92 = por %p90, %p91
      %p93 = scmp.ne.s32.totalorder %s81, %s82
      %p94 = scmp.eq.s32.totalorder %s25, 7
      %p95 = por %p93, %p94
      %p97 = scmp.ne.s32.totalorder %s82, %s96
      %p98 = scmp.eq.s32.totalorder %s25, 0
      %p99 = por %p97, %p98
      %s101 = sadd.s32 %s100, 1
      %p104 = scmp.eq.s32.totalorder %s19, 7
      %p105 = scmp.ne.s32.totalorder %s100, %s102
      %p106 = scmp.eq.s32.totalorder %s19, 0
      %p107 = por %p105, %p106
      %p108 = scmp.ne.s32.totalorder %s100, %s102
      %p109 = scmp.eq.s32.totalorder %s24, 7
      %p110 = por %p108, %p109
      %p111 = scmp.ne.s32.totalorder %s102, %s103
      %p112 = scmp.eq.s32.totalorder %s24, 0
      %p113 = por %p111, %p112
      %p114 = scmp.ne.s32.totalorder %s102, %s103
      %p115 = scmp.eq.s32.totalorder %s25, 7
      %p116 = por %p114, %p115
      %p118 = scmp.ne.s32.totalorder %s103, %s117
      %p119 = scmp.eq.s32.totalorder %s25, 0
      %p120 = por %p118, %p119
      %s121 = ssub.s32 %s19, %s26
      %p122 = scmp.eq.s32.totalorder %s121, 0
      %s124 = sadd.s32 %s123, 1
      %s125 = scalar_select %p122, %s123, %s124
      %p128 = pneg %p122
      %p129 = scmp.eq.s32.totalorder %s19, 7
      %p130 = por %p128, %p129
      %p131 = scmp.ne.s32.totalorder %s123, %s126
      %p132 = scmp.eq.s32.totalorder %s19, 0
      %p133 = por %p131, %p132
      %p134 = scmp.ne.s32.totalorder %s123, %s126
      %p135 = scmp.eq.s32.totalorder %s24, 7
      %p136 = por %p134, %p135
      %p137 = scmp.ne.s32.totalorder %s126, %s127
      %p138 = scmp.eq.s32.totalorder %s24, 0
      %p139 = por %p137, %p138
      %p140 = scmp.ne.s32.totalorder %s126, %s127
      %p141 = scmp.eq.s32.totalorder %s25, 7
      %p142 = por %p140, %p141
      %p144 = scmp.ne.s32.totalorder %s127, %s143
      %p145 = scmp.eq.s32.totalorder %s25, 0
      %p146 = por %p144, %p145
      %p147 = scmp.le.s32.totalorder 1, %s19
      %p148 = scmp.lt.s32.totalorder %s19, 9
      %p149 = pnand %p147, %p148
      %p150 = pneg %p149
      // Predicated region
      $region9: #{gated_graph_update.1} parent=5 // pred_check
        _
      $region10: #{gated_graph_update.1} parent=5 // pred_check_branch
        %152 = sbr.rel (%p149) target = $region12
      $region11: #{gated_graph_update.1} parent=5 // pred_region
        %s153 = ssub.s32 %s19, 1
        // Predicated region
        $region13: #{gated_graph_update.1} parent=11 // pred_check
          %p154 = pneg %p92
        $region14: #{gated_graph_update.1} parent=11 // pred_check_branch
          %156 = sbr.rel (%p154) target = $region16
        $region15: #{gated_graph_update.1} parent=11 // pred_region
          %158 = vsyncadd [#allocation6], 0
          %s159 = sshll.u32 %s2, 4
          %s160 = int_to_ptr.hbm [resolvable:$true] %s159
          %s161 = sshll.u32 [#allocation7], 4
          %s162 = int_to_ptr.vmem [resolvable:$true] %s161
          %167 = dma.hbm_to_vmem [thread:$0]  %s160, 8192, %s162, [#allocation6], 256, 256, 16
        $region16: #{gated_graph_update.1} parent=11 // pred_fallthru
          _
        // Predicated region
        $region17: #{gated_graph_update.1} parent=11 // pred_check
          %p168 = pneg %p113
        $region18: #{gated_graph_update.1} parent=11 // pred_check_branch
          %170 = sbr.rel (%p168) target = $region20
        $region19: #{gated_graph_update.1} parent=11 // pred_region
          _
        $region20: #{gated_graph_update.1} parent=11 // pred_fallthru
          _
      $region12: #{gated_graph_update.1} parent=5 // pred_fallthru
        _
      %p171 = scmp.lt.s32.totalorder %s19, 8
      // Predicated region
      $region21: #{gated_graph_update.1} parent=5 // pred_check
        %p172 = pneg %p171
      $region22: #{gated_graph_update.1} parent=5 // pred_check_branch
        %174 = sbr.rel (%p172) target = $region24
      $region23: #{gated_graph_update.1} parent=5 // pred_region
        // Predicated region
        $region25: #{gated_graph_update.1} parent=23 // pred_check
          %p175 = pneg %p39
        $region26: #{gated_graph_update.1} parent=23 // pred_check_branch
          %177 = sbr.rel (%p175) target = $region28
        $region27: #{gated_graph_update.1} parent=23 // pred_region
          %s178 = sand.u32 %s29, 1
          %s179 = scalar_lea.sflag [#allocation3], %s178
          %s180 = sand.u32 %s29, 1
          %s181 = smul.addr %s180, 32
          %s182 = scalar_lea.vmem [#allocation2], %s181
          %s183 = smul.u32 4, %s19
          %185 = vsyncadd %s179, 0
          %s186 = smul.addr %s183, 8
          %s187 = scalar_lea.hbm %s0, %s186
          %s188 = sshll.u32 %s187, 4
          %s189 = int_to_ptr.hbm [resolvable:$true] %s188
          %s190 = sshll.u32 %s182, 4
          %s191 = int_to_ptr.vmem [resolvable:$true] %s190
          %196 = dma.hbm_to_vmem [thread:$0]  %s189, 512, %s191, %s179, 128, 128, 8
        $region28: #{gated_graph_update.1} parent=23 // pred_fallthru
          _
        // Predicated region
        $region29: #{gated_graph_update.1} parent=23 // pred_check
          %p197 = pneg %p65
        $region30: #{gated_graph_update.1} parent=23 // pred_check_branch
          %199 = sbr.rel (%p197) target = $region32
        $region31: #{gated_graph_update.1} parent=23 // pred_region
          %s200 = sand.u32 %s19, 1
          %s201 = scalar_lea.sflag [#allocation6], %s200
          %s202 = sand.u32 %s55, 1
          %s203 = smul.addr %s202, 32
          %s204 = scalar_lea.vmem [#allocation5], %s203
          %s205 = smul.u32 4, %s19
          %207 = vsyncadd %s201, 0
          %s208 = smul.addr %s205, 8
          %s209 = scalar_lea.hbm %s1, %s208
          %s210 = sshll.u32 %s209, 4
          %s211 = int_to_ptr.hbm [resolvable:$true] %s210
          %s212 = sshll.u32 %s204, 4
          %s213 = int_to_ptr.vmem [resolvable:$true] %s212
          %218 = dma.hbm_to_vmem [thread:$0]  %s211, 512, %s213, %s201, 128, 128, 8
        $region32: #{gated_graph_update.1} parent=23 // pred_fallthru
          _
      $region24: #{gated_graph_update.1} parent=5 // pred_fallthru
        _
      %p219 = scmp.le.s32.totalorder 1, %s19
      %p220 = scmp.lt.s32.totalorder %s19, 9
      %p221 = pnand %p219, %p220
      %p222 = pneg %p221
      // Predicated region
      $region33: #{gated_graph_update.1} parent=5 // pred_check
        _
      $region34: #{gated_graph_update.1} parent=5 // pred_check_branch
        %224 = sbr.rel (%p221) target = $region36
      $region35: #{gated_graph_update.1} parent=5 // pred_region
        %s225 = ssub.s32 %s19, 1
        %s226 = sand.u32 %s32, 1
        %s227 = scalar_lea.sflag [#allocation3], %s226
        %s228 = sand.u32 %s32, 1
        %s229 = smul.addr %s228, 32
        %s230 = scalar_lea.vmem [#allocation2], %s229
        // Predicated region
        $region37: #{gated_graph_update.1} parent=35 // pred_check
          %p231 = pneg %p45
        $region38: #{gated_graph_update.1} parent=35 // pred_check_branch
          %233 = sbr.rel (%p231) target = $region40
        $region39: #{gated_graph_update.1} parent=35 // pred_region
          %235 = dma.done %s227, 512
        $region40: #{gated_graph_update.1} parent=35 // pred_fallthru
          _
        %s236 = sand.u32 %s24, 1
        %s237 = scalar_lea.sflag [#allocation6], %s236
        %s238 = sand.u32 %s58, 1
        %s239 = smul.addr %s238, 32
        %s240 = scalar_lea.vmem [#allocation5], %s239
        // Predicated region
        $region41: #{gated_graph_update.1} parent=35 // pred_check
          %p241 = pneg %p71
        $region42: #{gated_graph_update.1} parent=35 // pred_check_branch
          %243 = sbr.rel (%p241) target = $region44
        $region43: #{gated_graph_update.1} parent=35 // pred_region
          %245 = dma.done %s237, 512
        $region44: #{gated_graph_update.1} parent=35 // pred_fallthru
          _
        // Predicated region
        $region45: #{gated_graph_update.1} parent=35 // pred_check
          %p246 = pneg %p92
        $region46: #{gated_graph_update.1} parent=35 // pred_check_branch
          %248 = sbr.rel (%p246) target = $region48
        $region47: #{gated_graph_update.1} parent=35 // pred_region
          %250 = dma.done [#allocation6], 8192
        $region48: #{gated_graph_update.1} parent=35 // pred_fallthru
          _
        %s251 = sand.u32 %s32, 1
        %s252 = scalar_lea.sflag [#allocation3], %s251
        %s253 = sand.u32 %s32, 1
        %s254 = smul.addr %s253, 32
        %s255 = scalar_lea.vmem [#allocation2], %s254
        %p256 = pneg %p45
        %p257 = pneg %p42
        %s258 = sand.u32 %s24, 1
        %s259 = scalar_lea.sflag [#allocation6], %s258
        %s260 = sand.u32 %s58, 1
        %s261 = smul.addr %s260, 32
        %s262 = scalar_lea.vmem [#allocation5], %s261
        %p263 = pneg %p71
        %p264 = pneg %p68
        %p265 = pneg %p92
        %p266 = pneg %p89
        %p267 = pneg %p113
        %p268 = pneg %p110
        %p269 = pneg %p139
        %p270 = pneg %p136
        %s271 = sand.u32 %s126, 1
        %s272 = scalar_lea.sflag [#allocation4], %s271
        %s273 = sand.u32 %s126, 1
        %s274 = smul.addr %s273, 32
        %s275 = scalar_lea.vmem [#allocation8], %s274
        %s276 = smul.u32 4, %s24
        %s277 = smul.u32 4, %s24
        %s278 = smul.u32 4, %s24
        %v279 = vld [vmem:[%s230] sm:$0xff]
        %v280 = vld [vmem:[%s230 + $0x8] sm:$0xff]
        %v281 = vld [vmem:[%s230 + $0x10] sm:$0xff]
        %v282 = vld [vmem:[%s230 + $0x18] sm:$0xff]
        %v283 = vld [vmem:[%s240] sm:$0xff]
        %v284 = vld [vmem:[%s240 + $0x8] sm:$0xff]
        %v285 = vld [vmem:[%s240 + $0x10] sm:$0xff]
        %v286 = vld [vmem:[%s240 + $0x18] sm:$0xff]
        %v287 = vld [vmem:[#allocation7] sm:$0xff]
        %v288 = vld [vmem:[#allocation7 + $0x8] sm:$0xff]
        %v289 = vld [vmem:[#allocation7 + $0x10] sm:$0xff]
        %v290 = vld [vmem:[#allocation7 + $0x18] sm:$0xff]
        %v291 = vld [vmem:[#allocation7 + $0x20] sm:$0xff]
        %v292 = vld [vmem:[#allocation7 + $0x28] sm:$0xff]
        %v293 = vld [vmem:[#allocation7 + $0x30] sm:$0xff]
        %v294 = vld [vmem:[#allocation7 + $0x38] sm:$0xff]
        %v295 = vld [vmem:[#allocation7 + $0x40] sm:$0xff]
        %v296 = vld [vmem:[#allocation7 + $0x48] sm:$0xff]
        %v297 = vld [vmem:[#allocation7 + $0x50] sm:$0xff]
        %v298 = vld [vmem:[#allocation7 + $0x58] sm:$0xff]
        %v299 = vld [vmem:[#allocation7 + $0x60] sm:$0xff]
        %v300 = vld [vmem:[#allocation7 + $0x68] sm:$0xff]
        %v301 = vld [vmem:[#allocation7 + $0x70] sm:$0xff]
        %v302 = vld [vmem:[#allocation7 + $0x78] sm:$0xff]
        %v303 = vld [vmem:[#allocation7 + $0x80] sm:$0xff]
        %v304 = vld [vmem:[#allocation7 + $0x88] sm:$0xff]
        %v305 = vld [vmem:[#allocation7 + $0x90] sm:$0xff]
        %v306 = vld [vmem:[#allocation7 + $0x98] sm:$0xff]
        %v307 = vld [vmem:[#allocation7 + $0xa0] sm:$0xff]
        %v308 = vld [vmem:[#allocation7 + $0xa8] sm:$0xff]
        %v309 = vld [vmem:[#allocation7 + $0xb0] sm:$0xff]
        %v310 = vld [vmem:[#allocation7 + $0xb8] sm:$0xff]
        %v311 = vld [vmem:[#allocation7 + $0xc0] sm:$0xff]
        %v312 = vld [vmem:[#allocation7 + $0xc8] sm:$0xff]
        %v313 = vld [vmem:[#allocation7 + $0xd0] sm:$0xff]
        %v314 = vld [vmem:[#allocation7 + $0xd8] sm:$0xff]
        %v315 = vld [vmem:[#allocation7 + $0xe0] sm:$0xff]
        %v316 = vld [vmem:[#allocation7 + $0xe8] sm:$0xff]
        %v317 = vld [vmem:[#allocation7 + $0xf0] sm:$0xff]
        %v318 = vld [vmem:[#allocation7 + $0xf8] sm:$0xff]
        %v319 = vld [vmem:[#allocation7 + $0x100] sm:$0xff]
        %v320 = vld [vmem:[#allocation7 + $0x108] sm:$0xff]
        %v321 = vld [vmem:[#allocation7 + $0x110] sm:$0xff]
        %v322 = vld [vmem:[#allocation7 + $0x118] sm:$0xff]
        %v323 = vld [vmem:[#allocation7 + $0x120] sm:$0xff]
        %v324 = vld [vmem:[#allocation7 + $0x128] sm:$0xff]
        %v325 = vld [vmem:[#allocation7 + $0x130] sm:$0xff]
        %v326 = vld [vmem:[#allocation7 + $0x138] sm:$0xff]
        %v327 = vld [vmem:[#allocation7 + $0x140] sm:$0xff]
        %v328 = vld [vmem:[#allocation7 + $0x148] sm:$0xff]
        %v329 = vld [vmem:[#allocation7 + $0x150] sm:$0xff]
        %v330 = vld [vmem:[#allocation7 + $0x158] sm:$0xff]
        %v331 = vld [vmem:[#allocation7 + $0x160] sm:$0xff]
        %v332 = vld [vmem:[#allocation7 + $0x168] sm:$0xff]
        %v333 = vld [vmem:[#allocation7 + $0x170] sm:$0xff]
        %v334 = vld [vmem:[#allocation7 + $0x178] sm:$0xff]
        %v335 = vld [vmem:[#allocation7 + $0x180] sm:$0xff]
        %v336 = vld [vmem:[#allocation7 + $0x188] sm:$0xff]
        %v337 = vld [vmem:[#allocation7 + $0x190] sm:$0xff]
        %v338 = vld [vmem:[#allocation7 + $0x198] sm:$0xff]
        %v339 = vld [vmem:[#allocation7 + $0x1a0] sm:$0xff]
        %v340 = vld [vmem:[#allocation7 + $0x1a8] sm:$0xff]
        %v341 = vld [vmem:[#allocation7 + $0x1b0] sm:$0xff]
        %v342 = vld [vmem:[#allocation7 + $0x1b8] sm:$0xff]
        %v343 = vld [vmem:[#allocation7 + $0x1c0] sm:$0xff]
        %v344 = vld [vmem:[#allocation7 + $0x1c8] sm:$0xff]
        %v345 = vld [vmem:[#allocation7 + $0x1d0] sm:$0xff]
        %v346 = vld [vmem:[#allocation7 + $0x1d8] sm:$0xff]
        %v347 = vld [vmem:[#allocation7 + $0x1e0] sm:$0xff]
        %v348 = vld [vmem:[#allocation7 + $0x1e8] sm:$0xff]
        %v349 = vld [vmem:[#allocation7 + $0x1f0] sm:$0xff]
        %v350 = vld [vmem:[#allocation7 + $0x1f8] sm:$0xff]
        %v351 = vld [vmem:[%s3] sm:$0x3]
        %v353 = vperm.slane %v351, 0
        %v354 = vperm.slane %v351, 1
        %357 = vmatpush.msra.mxu0 %v317
        %358 = vmatpush.msra.mxu0 %v315
        %359 = vmatpush.msra.mxu0 %v313
        %360 = vmatpush.msra.mxu0 %v311
        %361 = vmatpush.msra.mxu0 %v309
        %362 = vmatpush.msra.mxu0 %v307
        %363 = vmatpush.msra.mxu0 %v305
        %364 = vmatpush.msra.mxu0 %v303
        %365 = vmatpush.msra.mxu0 %v301
        %366 = vmatpush.msra.mxu0 %v299
        %367 = vmatpush.msra.mxu0 %v297
        %368 = vmatpush.msra.mxu0 %v295
        %369 = vmatpush.msra.mxu0 %v293
        %370 = vmatpush.msra.mxu0 %v291
        %371 = vmatpush.msra.mxu0 %v289
        %372 = vmatpush.msra.mxu0 %v287
        %373 = vmatmul.f32.gmra.mxu0 %v279
        %v374 = vpop.f32.mrf.mxu0
        %v375 = vadd.f32 %v353, %v374
        %376 = vmatmul.f32.gmra.mxu0 %v280
        %v377 = vpop.f32.mrf.mxu0
        %v378 = vadd.f32 %v353, %v377
        %379 = vmatmul.f32.gmra.mxu0 %v281
        %v380 = vpop.f32.mrf.mxu0
        %v381 = vadd.f32 %v353, %v380
        %382 = vmatmul.f32.gmra.mxu0 %v282
        %v383 = vpop.f32.mrf.mxu0
        %v384 = vadd.f32 %v353, %v383
        %385 = vdwg.mxu0
        %386 = vmatpush.msra.mxu0 %v349
        %387 = vmatpush.msra.mxu0 %v347
        %388 = vmatpush.msra.mxu0 %v345
        %389 = vmatpush.msra.mxu0 %v343
        %390 = vmatpush.msra.mxu0 %v341
        %391 = vmatpush.msra.mxu0 %v339
        %392 = vmatpush.msra.mxu0 %v337
        %393 = vmatpush.msra.mxu0 %v335
        %394 = vmatpush.msra.mxu0 %v333
        %395 = vmatpush.msra.mxu0 %v331
        %396 = vmatpush.msra.mxu0 %v329
        %397 = vmatpush.msra.mxu0 %v327
        %398 = vmatpush.msra.mxu0 %v325
        %399 = vmatpush.msra.mxu0 %v323
        %400 = vmatpush.msra.mxu0 %v321
        %401 = vmatpush.msra.mxu0 %v319
        %402 = vmatmul.f32.gmra.mxu0 %v283
        %v403 = vpop.f32.mrf.mxu0
        %v404 = vadd.f32 %v375, %v403
        %405 = vmatmul.f32.gmra.mxu0 %v284
        %v406 = vpop.f32.mrf.mxu0
        %v407 = vadd.f32 %v378, %v406
        %408 = vmatmul.f32.gmra.mxu0 %v285
        %v409 = vpop.f32.mrf.mxu0
        %v410 = vadd.f32 %v381, %v409
        %411 = vmatmul.f32.gmra.mxu0 %v286
        %v412 = vpop.f32.mrf.mxu0
        %v413 = vadd.f32 %v384, %v412
        %414 = vdwg.mxu0
        %415 = vmatpush.msra.mxu0 %v318
        %416 = vmatpush.msra.mxu0 %v316
        %417 = vmatpush.msra.mxu0 %v314
        %418 = vmatpush.msra.mxu0 %v312
        %419 = vmatpush.msra.mxu0 %v310
        %420 = vmatpush.msra.mxu0 %v308
        %421 = vmatpush.msra.mxu0 %v306
        %422 = vmatpush.msra.mxu0 %v304
        %423 = vmatpush.msra.mxu0 %v302
        %424 = vmatpush.msra.mxu0 %v300
        %425 = vmatpush.msra.mxu0 %v298
        %426 = vmatpush.msra.mxu0 %v296
        %427 = vmatpush.msra.mxu0 %v294
        %428 = vmatpush.msra.mxu0 %v292
        %429 = vmatpush.msra.mxu0 %v290
        %430 = vmatpush.msra.mxu0 %v288
        %431 = vmatmul.f32.gmra.mxu0 %v279
        %v432 = vpop.f32.mrf.mxu0
        %v433 = vadd.f32 %v354, %v432
        %434 = vmatmul.f32.gmra.mxu0 %v280
        %v435 = vpop.f32.mrf.mxu0
        %v436 = vadd.f32 %v354, %v435
        %437 = vmatmul.f32.gmra.mxu0 %v281
        %v438 = vpop.f32.mrf.mxu0
        %v439 = vadd.f32 %v354, %v438
        %440 = vmatmul.f32.gmra.mxu0 %v282
        %v441 = vpop.f32.mrf.mxu0
        %v442 = vadd.f32 %v354, %v441
        %443 = vdwg.mxu0
        %444 = vmatpush.msra.mxu0 %v350
        %445 = vmatpush.msra.mxu0 %v348
        %446 = vmatpush.msra.mxu0 %v346
        %447 = vmatpush.msra.mxu0 %v344
        %448 = vmatpush.msra.mxu0 %v342
        %449 = vmatpush.msra.mxu0 %v340
        %450 = vmatpush.msra.mxu0 %v338
        %451 = vmatpush.msra.mxu0 %v336
        %452 = vmatpush.msra.mxu0 %v334
        %453 = vmatpush.msra.mxu0 %v332
        %454 = vmatpush.msra.mxu0 %v330
        %455 = vmatpush.msra.mxu0 %v328
        %456 = vmatpush.msra.mxu0 %v326
        %457 = vmatpush.msra.mxu0 %v324
        %458 = vmatpush.msra.mxu0 %v322
        %459 = vmatpush.msra.mxu0 %v320
        %460 = vmatmul.f32.gmra.mxu0 %v283
        %v461 = vpop.f32.mrf.mxu0
        %v462 = vadd.f32 %v433, %v461
        %463 = vmatmul.f32.gmra.mxu0 %v284
        %v464 = vpop.f32.mrf.mxu0
        %v465 = vadd.f32 %v436, %v464
        %466 = vmatmul.f32.gmra.mxu0 %v285
        %v467 = vpop.f32.mrf.mxu0
        %v468 = vadd.f32 %v439, %v467
        %469 = vmatmul.f32.gmra.mxu0 %v286
        %v470 = vpop.f32.mrf.mxu0
        %v471 = vadd.f32 %v442, %v470
        %472 = vdwg.mxu0
        %v473 = vtanh.pop %v404
        %v474 = vtanh.pop %v462
        %v475 = vtanh.pop %v407
        %v476 = vtanh.pop %v465
        %v477 = vtanh.pop %v410
        %v478 = vtanh.pop %v468
        %v479 = vtanh.pop %v413
        %v480 = vtanh.pop %v471
        %v481 = vmul.f32 %v473, 0.5
        %v482 = vmul.f32 %v475, 0.5
        %v483 = vmul.f32 %v477, 0.5
        %v484 = vmul.f32 %v479, 0.5
        %v485 = vadd.f32 %v481, 0.5
        %v486 = vadd.f32 %v482, 0.5
        %v487 = vadd.f32 %v483, 0.5
        %v488 = vadd.f32 %v484, 0.5
        %v489 = vsub.f32 %v474, %v279
        %v490 = vsub.f32 %v476, %v280
        %v491 = vsub.f32 %v478, %v281
        %v492 = vsub.f32 %v480, %v282
        %v493 = vmul.f32 %v485, %v489
        %v494 = vmul.f32 %v486, %v490
        %v495 = vmul.f32 %v487, %v491
        %v496 = vmul.f32 %v488, %v492
        %v497 = vadd.f32 %v279, %v493
        %v498 = vadd.f32 %v280, %v494
        %v499 = vadd.f32 %v281, %v495
        %v500 = vadd.f32 %v282, %v496
        %501 = vst [vmem:[%s275] sm:$0xff] %v497
        %502 = vst [vmem:[%s275 + $0x8] sm:$0xff] %v498
        %503 = vst [vmem:[%s275 + $0x10] sm:$0xff] %v499
        %504 = vst [vmem:[%s275 + $0x18] sm:$0xff] %v500
        %s505 = sand.u32 %s126, 1
        %s506 = scalar_lea.sflag [#allocation4], %s505
        %s507 = sand.u32 %s126, 1
        %s508 = smul.addr %s507, 32
        %s509 = scalar_lea.vmem [#allocation8], %s508
        // Predicated region
        $region49: #{gated_graph_update.1} parent=35 // pred_check
          %p510 = pneg %p136
        $region50: #{gated_graph_update.1} parent=35 // pred_check_branch
          %512 = sbr.rel (%p510) target = $region52
        $region51: #{gated_graph_update.1} parent=35 // pred_region
          %s513 = smul.u32 4, %s24
          %515 = vsyncadd %s506, 0
          %s516 = smul.addr %s513, 8
          %s517 = scalar_lea.hbm %s4, %s516
          %s518 = sshll.u32 %s509, 4
          %s519 = int_to_ptr.vmem [resolvable:$true] %s518
          %s520 = sshll.u32 %s517, 4
          %s521 = int_to_ptr.hbm [resolvable:$true] %s520
          %526 = dma.vmem_to_hbm [thread:$0]  %s519, 512, %s521, %s506, 128, 128, 8
        $region52: #{gated_graph_update.1} parent=35 // pred_fallthru
          _
      $region36: #{gated_graph_update.1} parent=5 // pred_fallthru
        _
      %p527 = scmp.le.s32.totalorder 2, %s19
      // Predicated region
      $region53: #{gated_graph_update.1} parent=5 // pred_check
        %p528 = pneg %p527
      $region54: #{gated_graph_update.1} parent=5 // pred_check_branch
        %530 = sbr.rel (%p528) target = $region56
      $region55: #{gated_graph_update.1} parent=5 // pred_region
        %s531 = ssub.s32 %s19, 2
        // Predicated region
        $region57: #{gated_graph_update.1} parent=55 // pred_check
          %p532 = pneg %p142
        $region58: #{gated_graph_update.1} parent=55 // pred_check_branch
          %534 = sbr.rel (%p532) target = $region60
        $region59: #{gated_graph_update.1} parent=55 // pred_region
          %s535 = sand.u32 %s127, 1
          %s536 = scalar_lea.sflag [#allocation4], %s535
          %s537 = sand.u32 %s127, 1
          %s538 = smul.addr %s537, 32
          %s539 = scalar_lea.vmem [#allocation8], %s538
          %541 = dma.done %s536, 512
        $region60: #{gated_graph_update.1} parent=55 // pred_fallthru
          _
      $region56: #{gated_graph_update.1} parent=5 // pred_fallthru
        _
    $region6: #{gated_graph_update.1} parent=1 // loop_footer
      %s23 = sadd.s32 1, %s19
    $region7: #{gated_graph_update.1} parent=1 // loop_footer_branch
      %18 = sbr.rel target = $region3
    $region8: #{gated_graph_update.1} parent=1 // loop_exit
      _
    %542 = vsyncpa [#allocation3], 1
    %s543 = scalar_lea.sflag [#allocation3], 1
    %544 = vsyncpa %s543, 1
    %545 = vsyncpa [#allocation6], 1
    %s546 = scalar_lea.sflag [#allocation6], 1
    %547 = vsyncpa %s546, 1
    %548 = vsyncpa [#allocation4], 1
    %s549 = scalar_lea.sflag [#allocation4], 1
    %550 = vsyncpa %s549, 1

</llo_original>
